<compile_context>
chip_gen: v7x
topology: tpu7x:2x2x1
jax: 0.10.0
libtpu: 0.0.40
codegen_flags: <defaults>
</compile_context>

<pallas_src>
import functools
import math

import jax
import jax.numpy as jnp
from jax.experimental import pallas as pl
from jax.experimental.pallas import tpu as pltpu


# --------------------------------------------------------------------------
# Helpers
# --------------------------------------------------------------------------
def _round_up(x: int, m: int) -> int:
    return ((x + m - 1) // m) * m


def _choose_tile(dim: int, align: int, cap: int):
    """Return (tile, padded_dim).

    Pads `dim` only to the hardware layout granularity `align`, then picks the
    largest tile (multiple of `align`, <= cap) whose tile-induced padding is
    <= ~6%; `align` itself always divides the aligned dim, so this terminates
    with zero-waste in the worst case.
    """
    dim_a = _round_up(max(int(dim), 1), align)
    cap_a = max(align, (cap // align) * align)
    if dim_a <= cap_a:
        return dim_a, dim_a
    for t in range(cap_a, align - 1, -align):
        p = _round_up(dim_a, t)
        if (p - dim_a) * 16 <= dim_a:  # <= 6.25% padding overhead
            return t, p
    return align, dim_a  # unreachable (t=align has zero waste), kept for safety


def _vmem_limit_bytes() -> int:
    """Generation-aware VMEM budget (~80% of physical per-core VMEM)."""
    cap = None
    try:
        cap = int(getattr(pltpu.get_tpu_info(), "vmem_capacity_bytes", 0)) or None
    except Exception:
        cap = None
    if cap is None:
        cap = 64 * 1024 * 1024  # conservative (v7x per-TC) fallback
    return max(16 * 1024 * 1024, (cap * 4) // 5)


def _softplus(x):
    # Lean, stable softplus: max(x,0) + log1p(exp(-|x|)).
    # Keeps the transcendental on the EUP slot with minimal VPU side work.
    return jnp.maximum(x, 0.0) + jnp.log1p(jnp.exp(-jnp.abs(x)))


# --------------------------------------------------------------------------
# Element-wise softplus pre-pass (only used when the weight is re-used across
# several batch tiles). Big lane-dense blocks: full in_features width, ~4 MiB
# of f32 per grid step, so the ~0.35 us per-step overhead is negligible.
# --------------------------------------------------------------------------
def _softplus_kernel(w_ref, o_ref):
    o_ref[...] = _softplus(w_ref[...].astype(jnp.float32)).astype(o_ref.dtype)


def _softplus_weight(w_p, out_dtype, vmem_limit):
    out_p, in_p = w_p.shape
    rows = (4 * 1024 * 1024) // max(in_p * 4, 1)
    rows = min(out_p, max(8, (rows // 8) * 8))
    while out_p % rows:
        rows -= 8
    grid = (out_p // rows,)
    cost = pl.CostEstimate(
        flops=out_p * in_p,
        transcendentals=2 * out_p * in_p,
        bytes_accessed=out_p * in_p
        * (w_p.dtype.itemsize + jnp.dtype(out_dtype).itemsize),
    )
    return pl.pallas_call(
        _softplus_kernel,
        out_shape=jax.ShapeDtypeStruct((out_p, in_p), out_dtype),
        grid=grid,
        in_specs=[pl.BlockSpec((rows, in_p), lambda i: (i, 0))],
        out_specs=pl.BlockSpec((rows, in_p), lambda i: (i, 0)),
        compiler_params=pltpu.CompilerParams(
            dimension_semantics=("parallel",),
            vmem_limit_bytes=vmem_limit,
        ),
        cost_estimate=cost,
    )(w_p)


# --------------------------------------------------------------------------
# Matmul kernel:  y = x @ w.T (+ bias), f32 accumulation in VMEM scratch.
# Weight stays in its natural (out, in) layout (contract over dim 1 of both
# operands -> no in-kernel transpose). Optionally fuses softplus on the tile.
# --------------------------------------------------------------------------
def _matmul_kernel(*refs, fuse_softplus, has_bias, mxu_dtype):
    if has_bias:
        x_ref, w_ref, b_ref, o_ref, acc_ref = refs
    else:
        x_ref, w_ref, o_ref, acc_ref = refs
        b_ref = None

    k = pl.program_id(2)

    @pl.when(k == 0)
    def _init():
        if b_ref is None:
            acc_ref[...] = jnp.zeros_like(acc_ref)
        else:
            # Bias folded into the accumulator init (f32); store path stays lean.
            acc_ref[...] = jnp.broadcast_to(b_ref[...], acc_ref.shape)

    x = x_ref[...]
    if x.dtype != mxu_dtype:
        x = x.astype(mxu_dtype)
    w = w_ref[...]
    if fuse_softplus:
        w = _softplus(w.astype(jnp.float32)).astype(mxu_dtype)
    elif w.dtype != mxu_dtype:
        w = w.astype(mxu_dtype)

    acc_ref[...] += jax.lax.dot_general(
        x, w,
        dimension_numbers=(((1,), (1,)), ((), ())),
        preferred_element_type=jnp.float32,
    )

    @pl.when(k == pl.num_programs(2) - 1)
    def _store():
        o_ref[...] = acc_ref[...].astype(o_ref.dtype)


# --------------------------------------------------------------------------
# Public wrapper
# --------------------------------------------------------------------------
def positive_linear(x, weight, bias=None, *, mxu_dtype=None,
                    tm=None, tn=None, tk=None, force_path=None):
    """x: (B, in_f), weight: (out_f, in_f), bias: (out_f,) or None.

    mxu_dtype: dtype fed to the MXU (default: x.dtype). Pass jnp.bfloat16 to
    opt f32 models into the bf16 MXU fast path (f32 accumulation is kept).
    """
    B, in_f = x.shape
    out_f, in_f_w = weight.shape
    assert in_f == in_f_w, "weight in_features mismatch"

    out_dtype = x.dtype
    mxu_dtype = jnp.dtype(x.dtype if mxu_dtype is None else mxu_dtype)
    vmem_limit = _vmem_limit_bytes()

    # Sublane granularity on B: 16 for 16-bit activations (packed vregs), else 8.
    m_align = 16 if jnp.dtype(x.dtype).itemsize == 2 else 8

    tn_given, tk_given = tn is not None, tk is not None

    if tm is None:
        tm, B_p = _choose_tile(B, m_align, 512)
    else:
        tm = _round_up(tm, m_align)
        B_p = _round_up(B, tm)
    if tn is None:
        tn, out_p = _choose_tile(out_f, 128, 512)
    else:
        tn = _round_up(tn, 128)
        out_p = _round_up(out_f, tn)
    if tk is None:
        tk, in_p = _choose_tile(in_f, 128, 2048)
    else:
        tk = _round_up(tk, 128)
        in_p = _round_up(in_f, tk)

    x_b = jnp.dtype(x.dtype).itemsize
    w_b = mxu_dtype.itemsize
    o_b = jnp.dtype(out_dtype).itemsize

    def _tile_bytes(tm_, tn_, tk_):  # double-buffered tiles + f32 accumulator
        return (2 * (tm_ * tk_ * x_b + tn_ * tk_ * w_b + tm_ * tn_ * o_b)
                + tm_ * tn_ * 4)

    while _tile_bytes(tm, tn, tk) > (vmem_limit * 3) // 4 and tk > 128:
        tk = max(128, tk // 2)
        in_p = _round_up(in_f, tk)
    while _tile_bytes(tm, tn, tk) > (vmem_limit * 3) // 4 and tn > 128:
        tn = max(128, tn // 2)
        out_p = _round_up(out_f, tn)

    num_i = B_p // tm

    # Weight-resident feasibility: softplus(W) (assumed double-buffered) plus
    # double-buffered x/out tiles and the accumulator must fit the budget.
    resident_bytes = (2 * out_p * in_p * w_b
                      + 2 * (tm * in_p * x_b + tm * out_p * o_b)
                      + tm * out_p * 4)
    resident_ok = resident_bytes <= (vmem_limit * 9) // 10

    if force_path is None:
        if num_i == 1:
            path = "fused"       # read W once, softplus in-kernel, no pre-pass
        elif resident_ok and not (tn_given or tk_given):
            path = "resident"    # w_pos DMA'd once, stays resident across batch tiles
        else:
            path = "tiled"
    else:
        path = force_path
    assert path in ("fused", "resident", "tiled")

    if path == "resident":
        tn, tk = out_p, in_p
    elif (path == "fused" and not tn_given and out_p // tn == 1
          and out_p >= 256 and (out_p // 2) % 128 == 0):
        tn = out_p // 2  # >=2 programs on the parallel j axis (feed both v7x TCs)

    # -------- zero-pad inputs (exactness invariant documented above) --------
    x_p = x if (B_p, in_p) == (B, in_f) else jnp.pad(
        x, ((0, B_p - B), (0, in_p - in_f)))
    w_p = weight if (out_p, in_p) == (out_f, in_f) else jnp.pad(
        weight, ((0, out_p - out_f), (0, in_p - in_f)))

    w_in = w_p if path == "fused" else _softplus_weight(w_p, mxu_dtype, vmem_limit)

    grid = (B_p // tm, out_p // tn, in_p // tk)

    x_spec = pl.BlockSpec((tm, tk), lambda i, j, k: (i, k))
    if path == "fused" and grid[1] * grid[2] >= 3:
        # GEMV-like regime is weight-bandwidth-bound: deepen the weight pipeline.
        w_spec = pl.BlockSpec((tn, tk), lambda i, j, k: (j, k),
                              pipeline_mode=pl.Buffered(3))
    else:
        w_spec = pl.BlockSpec((tn, tk), lambda i, j, k: (j, k))
    o_spec = pl.BlockSpec((tm, tn), lambda i, j, k: (i, j))
    scratch = [pltpu.VMEM((tm, tn), jnp.float32)]

    cost = pl.CostEstimate(
        flops=2 * B_p * in_p * out_p,
        transcendentals=(2 * out_p * in_p) if path == "fused" else 0,
        bytes_accessed=(grid[1] * B_p * in_p * x_b
                        + (grid[0] if path == "tiled" else 1)
                        * out_p * in_p * w_in.dtype.itemsize
                        + B_p * out_p * o_b),
    )
    cparams = pltpu.CompilerParams(
        dimension_semantics=("parallel", "parallel", "arbitrary"),
        vmem_limit_bytes=vmem_limit,
    )

    has_bias = bias is not None
    kernel = functools.partial(
        _matmul_kernel,
        fuse_softplus=(path == "fused"),
        has_bias=has_bias,
        mxu_dtype=mxu_dtype,
    )
    out_shape = jax.ShapeDtypeStruct((B_p, out_p), out_dtype)

    if has_bias:
        b_p = bias.astype(jnp.float32)
        if out_p != out_f:
            b_p = jnp.pad(b_p, (0, out_p - out_f))
        b2d = b_p.reshape(1, out_p)
        y_p = pl.pallas_call(
            kernel, out_shape=out_shape, grid=grid,
            in_specs=[x_spec, w_spec,
                      pl.BlockSpec((1, tn), lambda i, j, k: (0, j))],
            out_specs=o_spec, scratch_shapes=scratch,
            compiler_params=cparams, cost_estimate=cost,
        )(x_p, w_in, b2d)
    else:
        y_p = pl.pallas_call(
            kernel, out_shape=out_shape, grid=grid,
            in_specs=[x_spec, w_spec],
            out_specs=o_spec, scratch_shapes=scratch,
            compiler_params=cparams, cost_estimate=cost,
        )(x_p, w_in)

    if (B_p, out_p) == (B, out_f):
        return y_p
    return y_p[:B, :out_f]


def init_positive_linear_params(key, in_features, out_features, weight_init_offset=-2.0):
    """Re-implementation of PositiveLinear.reset_parameters().

    kaiming_uniform_(a=sqrt(5)) on a (out, in) weight reduces to
    U(-1/sqrt(fan_in), 1/sqrt(fan_in)); then weight += weight_init_offset.
    bias ~ U(-1/sqrt(fan_in), 1/sqrt(fan_in)).
    """
    kw, kb = jax.random.split(key)
    bound = 1.0 / math.sqrt(in_features) if in_features > 0 else 0.0
    weight = jax.random.uniform(
        kw, (out_features, in_features), jnp.float32, -bound, bound
    ) + weight_init_offset
    bias = jax.random.uniform(kb, (out_features,), jnp.float32, -bound, bound)
    return weight, bias


if __name__ == "__main__":
    key = jax.random.PRNGKey(0)
    k_x, k_p, k_x2, k_p2 = jax.random.split(key, 4)

    def ref_fn(x, w, b=None):
        y = x.astype(jnp.float32) @ jax.nn.softplus(w.astype(jnp.float32)).T
        if b is not None:
            y = y + b.astype(jnp.float32)
        return y

    def check(name, y, y_ref, atol, rtol):
        y = jax.block_until_ready(y)
        assert y.shape == y_ref.shape, f"shape mismatch: {name}"
        ok = jnp.allclose(y.astype(jnp.float32), y_ref, atol=atol, rtol=rtol)
        assert bool(ok), f"mismatch vs reference: {name}"

    # Case 1: tiny f32 layer -> fused-softplus path (single batch tile), +/- bias.
    B, in_f, out_f = 8, 32, 32
    x = jax.random.normal(k_x, (B, in_f), jnp.float32)
    w, b = init_positive_linear_params(k_p, in_f, out_f)
    check("fused+bias", positive_linear(x, w, b), ref_fn(x, w, b), 1e-4, 1e-4)
    check("fused no-bias", positive_linear(x, w, None), ref_fn(x, w), 1e-4, 1e-4)

    # Case 2: multiple batch tiles, small weight -> weight-resident path.
    B2, in2, out2 = 64, 96, 160
    x2 = jax.random.normal(k_x2, (B2, in2), jnp.float32)
    w2, b2 = init_positive_linear_params(k_p2, in2, out2)
    check("resident+bias", positive_linear(x2, w2, b2, tm=16),
          ref_fn(x2, w2, b2), 1e-4, 1e-4)

    # Case 3: forced general tiled path with a real k-reduction loop.
    B3, in3, out3 = 48, 320, 256
    x3 = jax.random.normal(jax.random.fold_in(key, 3), (B3, in3), jnp.float32)
    w3, b3 = init_positive_linear_params(jax.random.fold_in(key, 4), in3, out3)
    check("tiled+bias",
          positive_linear(x3, w3, b3, tm=16, tn=128, tk=128, force_path="tiled"),
          ref_fn(x3, w3, b3), 1e-4, 1e-4)

    # Case 4: fused path with a multi-step weight stream (Buffered(3) weight DMA).
    B4, in4, out4 = 8, 512, 256
    x4 = jax.random.normal(jax.random.fold_in(key, 5), (B4, in4), jnp.float32)
    w4, b4 = init_positive_linear_params(jax.random.fold_in(key, 6), in4, out4)
    check("fused multi-k", positive_linear(x4, w4, b4, tn=128, tk=128),
          ref_fn(x4, w4, b4), 1e-4, 1e-4)

    # Case 5: bf16 activations (bf16 MXU fast path, B padded to 16).
    xb = x.astype(jnp.bfloat16)
    check("bf16", positive_linear(xb, w, b), ref_fn(xb, w, b), 3e-2, 3e-2)

    # Case 6: f32 activations with opt-in bf16 MXU operands (f32 accumulation).
    check("f32+bf16-mxu", positive_linear(x, w, b, mxu_dtype=jnp.bfloat16),
          ref_fn(x, w, b), 3e-2, 3e-2)

    print("KERNEL_OK")
</pallas_src>

<mosaic_0001>
module attributes {stable_mosaic.version = 11 : i64} {
  func.func @_matmul_kernel(%arg0: i32, %arg1: i32, %arg2: i32, %arg3: memref<8x128xf32, #tpu.memory_space<vmem>>, %arg4: memref<128x128xf32, #tpu.memory_space<vmem>>, %arg5: memref<1x128xf32, #tpu.memory_space<vmem>>, %arg6: memref<8x128xf32, #tpu.memory_space<vmem>>, %arg7: memref<8x128xf32, #tpu.memory_space<vmem>>) attributes {dimension_semantics = [#tpu.dimension_semantics<parallel>, #tpu.dimension_semantics<parallel>, #tpu.dimension_semantics<arbitrary>], iteration_bounds = array<i64: 1, 1, 1>, scalar_prefetch = 0 : i64, scratch_operands = 1 : i64, tpu.core_type = #tpu.core_type<tc>, window_params = [{transform_indices = @transform_0, window_bounds = array<i64: 8, 128>}, {transform_indices = @transform_1, window_bounds = array<i64: 128, 128>}, {transform_indices = @transform_2, window_bounds = array<i64: 1, 128>}, {transform_indices = @transform_3, window_bounds = array<i64: 8, 128>}]} {
    %c0_i32 = arith.constant 0 : i32
    %0 = arith.cmpi eq, %arg2, %c0_i32 : i32
    %1 = arith.extui %0 : i1 to i32
    %c0_i32_0 = arith.constant 0 : i32
    %2 = arith.cmpi ne, %1, %c0_i32_0 : i32
    scf.if %2 {
      %c0_12 = arith.constant 0 : index
      %c0_13 = arith.constant 0 : index
      %20 = vector.load %arg5[%c0_12, %c0_13] : memref<1x128xf32, #tpu.memory_space<vmem>>, vector<1x128xf32>
      %21 = vector.shape_cast %20 : vector<1x128xf32> to vector<1x128xf32>
      %22 = vector.broadcast %21 : vector<1x128xf32> to vector<8x128xf32>
      %c0_14 = arith.constant 0 : index
      %c0_15 = arith.constant 0 : index
      %23 = vector.load %arg7[%c0_14, %c0_15] : memref<8x128xf32, #tpu.memory_space<vmem>>, vector<8x128xf32>
      tpu.vector_store %arg7[%c0_14, %c0_15], %22 {strides = array<i32>} : memref<8x128xf32, #tpu.memory_space<vmem>>, vector<8x128xf32>,
    } else {
    }
    %c0 = arith.constant 0 : index
    %c0_1 = arith.constant 0 : index
    %3 = vector.load %arg3[%c0, %c0_1] : memref<8x128xf32, #tpu.memory_space<vmem>>, vector<8x128xf32>
    %c0_2 = arith.constant 0 : index
    %c0_3 = arith.constant 0 : index
    %4 = vector.load %arg4[%c0_2, %c0_3] : memref<128x128xf32, #tpu.memory_space<vmem>>, vector<128x128xf32>
    %cst = arith.constant 0.000000e+00 : f32
    %5 = vector.broadcast %cst : f32 to vector<128x128xf32>
    %6 = arith.maximumf %4, %5 : vector<128x128xf32>
    %7 = math.absf %4 : vector<128x128xf32>
    %cst_4 = arith.constant 0.000000e+00 : f32
    %8 = vector.broadcast %cst_4 : f32 to vector<128x128xf32>
    %9 = arith.subf %8, %7 : vector<128x128xf32>
    %10 = math.exp %9 : vector<128x128xf32>
    %11 = math.log1p %10 : vector<128x128xf32>
    %12 = arith.addf %6, %11 : vector<128x128xf32>
    %c0_5 = arith.constant 0 : index
    %c0_6 = arith.constant 0 : index
    %13 = vector.load %arg7[%c0_5, %c0_6] : memref<8x128xf32, #tpu.memory_space<vmem>>, vector<8x128xf32>
    %cst_7 = arith.constant dense<0.000000e+00> : vector<8x128xf32>
    %14 = tpu.matmul %3, %12, %cst_7 {dimension_numbers = #tpu.dot_dimension_numbers<[1], [1], [0], [0], [0, 0, 1, 0], [], []>} : vector<8x128xf32>, vector<128x128xf32>, vector<8x128xf32> -> vector<8x128xf32>
    %15 = arith.addf %13, %14 : vector<8x128xf32>
    %c0_8 = arith.constant 0 : index
    %c0_9 = arith.constant 0 : index
    %16 = vector.load %arg7[%c0_8, %c0_9] : memref<8x128xf32, #tpu.memory_space<vmem>>, vector<8x128xf32>
    tpu.vector_store %arg7[%c0_8, %c0_9], %15 {strides = array<i32>} : memref<8x128xf32, #tpu.memory_space<vmem>>, vector<8x128xf32>,
    %c0_i32_10 = arith.constant 0 : i32
    %17 = arith.cmpi eq, %arg2, %c0_i32_10 : i32
    %18 = arith.extui %17 : i1 to i32
    %c0_i32_11 = arith.constant 0 : i32
    %19 = arith.cmpi ne, %18, %c0_i32_11 : i32
    scf.if %19 {
      %c0_12 = arith.constant 0 : index
      %c0_13 = arith.constant 0 : index
      %20 = vector.load %arg7[%c0_12, %c0_13] : memref<8x128xf32, #tpu.memory_space<vmem>>, vector<8x128xf32>
      %c0_14 = arith.constant 0 : index
      %c0_15 = arith.constant 0 : index
      %21 = vector.load %arg6[%c0_14, %c0_15] : memref<8x128xf32, #tpu.memory_space<vmem>>, vector<8x128xf32>
      tpu.vector_store %arg6[%c0_14, %c0_15], %20 {strides = array<i32>} : memref<8x128xf32, #tpu.memory_space<vmem>>, vector<8x128xf32>,
    } else {
    }
    return
  }
  func.func @transform_0(%arg0: i32, %arg1: i32, %arg2: i32) -> (i32, i32) {
    %c0_i32 = arith.constant 0 : i32
    return %arg0, %arg2 : i32, i32
  }
  func.func @transform_1(%arg0: i32, %arg1: i32, %arg2: i32) -> (i32, i32) {
    %c0_i32 = arith.constant 0 : i32
    return %arg1, %arg2 : i32, i32
  }
  func.func @transform_2(%arg0: i32, %arg1: i32, %arg2: i32) -> (i32, i32) {
    %c0_i32 = arith.constant 0 : i32
    %c0_i32_0 = arith.constant 0 : i32
    return %c0_i32, %arg1 : i32, i32
  }
  func.func @transform_3(%arg0: i32, %arg1: i32, %arg2: i32) -> (i32, i32) {
    %c0_i32 = arith.constant 0 : i32
    return %arg0, %arg1 : i32, i32
  }
}

</mosaic_0001>

<llo_original>
// kernel: tpu_custom_call.1
$region0: #{tpu_custom_call.1}
  #allocation0 [shape = 'u32[]', space=smem, size = 0x4, offset = 0x4, fixed_abs, tag = 'smem constant byte address 0x4 - core index']
  #allocation1 [shape = 'u32[144,128]{1,0:T(1,128)}', space=vmem, size = 0x12000, scoped, tag = 'internal scratch']
  #allocation2 [shape = 'f32[8,128]{1,0:T(8,128)}', space=vmem, size = 0x1000, scoped, tag = 'scratch operand']
  %s0 = inlined_call_operand.hbm [shape: f32[8,128], index: 0, kind: input, shape index: {}]
  %s1 = inlined_call_operand.hbm [shape: f32[128,128], index: 1, kind: input, shape index: {}]
  %s2 = inlined_call_operand.vmem [shape: f32[1,128], index: 2, kind: input, shape index: {}]
  %s3 = inlined_call_operand.hbm [shape: f32[8,128], index: 3, kind: output, shape index: {}]
  %s4 = sld [smem:[#allocation0]]
  $region38: #{tpu_custom_call.1} parent=0
    _
  %s6 = ssub.s32 1, %s4
  %s7 = scalar_select 0, %s6, %s4
  $region1: #{tpu_custom_call.1} parent=0
    #allocation3 [shape = 'u8[4096]{0}', space=vmem, size = 0x1000, scoped, tag = 'input window, operand 0, single buffered']
    #allocation4 [shape = 's32[1]{0}', space=sflag, size = 0x4, scoped, tag = 'scoped memory for tpu_custom_call.1']
    #allocation5 [shape = 's32[1]{0}', space=sflag, size = 0x4, scoped, tag = 'scoped memory for tpu_custom_call.1']
    #allocation6 [shape = 'u8[65536]{0}', space=vmem, size = 0x10000, scoped, tag = 'input window, operand 1, single buffered']
    #allocation7 [shape = 's32[1]{0}', space=sflag, size = 0x4, scoped, tag = 'scoped memory for tpu_custom_call.1']
    #allocation8 [shape = 'u8[4096]{0}', space=vmem, size = 0x1000, scoped, tag = 'output window, operand 0, single buffered']
    %8 = vsyncpa [#allocation4], 0
    %9 = vsyncpa [#allocation7], 0
    %10 = vsyncpa [#allocation5], 0
    // Predicated region
    $region2: #{tpu_custom_call.1} parent=1 // pred_check
      _
    $region3: #{tpu_custom_call.1} parent=1 // pred_check_branch
      %12 = sbr.rel (0) target = $region5
    $region4: #{tpu_custom_call.1} parent=1 // pred_region
      %s14 = ssub.s32 128, 128
      %15 = vsyncadd [#allocation4], %s14
      %s17 = sshll.u32 [#allocation3], 4
      %s18 = int_to_ptr.vmem [resolvable:$true] %s17
      %20 = dma.hbm_to_vmem [thread:$0]  %s0, 128, %s18, [#allocation4]
    $region5: #{tpu_custom_call.1} parent=1 // pred_fallthru
      _
    // Predicated region
    $region6: #{tpu_custom_call.1} parent=1 // pred_check
      _
    $region7: #{tpu_custom_call.1} parent=1 // pred_check_branch
      %22 = sbr.rel (0) target = $region9
    $region8: #{tpu_custom_call.1} parent=1 // pred_region
      %s24 = ssub.s32 2048, 2048
      %25 = vsyncadd [#allocation7], %s24
      %s26 = sshll.u32 [#allocation6], 4
      %s27 = int_to_ptr.vmem [resolvable:$true] %s26
      %32 = dma.hbm_to_vmem [thread:$0]  %s1, 2048, %s27, [#allocation7], 128, 128, 8
    $region9: #{tpu_custom_call.1} parent=1 // pred_fallthru
      _
    // Predicated region
    $region10: #{tpu_custom_call.1} parent=1 // pred_check
      _
    $region11: #{tpu_custom_call.1} parent=1 // pred_check_branch
      %34 = sbr.rel (0) target = $region13
    $region12: #{tpu_custom_call.1} parent=1 // pred_region
      _
    $region13: #{tpu_custom_call.1} parent=1 // pred_fallthru
      _
    // Predicated region
    $region14: #{tpu_custom_call.1} parent=1 // pred_check
      _
    $region15: #{tpu_custom_call.1} parent=1 // pred_check_branch
      %36 = sbr.rel (0) target = $region17
    $region16: #{tpu_custom_call.1} parent=1 // pred_region
      %37 = dma.done [#allocation4], 128
    $region17: #{tpu_custom_call.1} parent=1 // pred_fallthru
      _
    // Predicated region
    $region18: #{tpu_custom_call.1} parent=1 // pred_check
      _
    $region19: #{tpu_custom_call.1} parent=1 // pred_check_branch
      %39 = sbr.rel (0) target = $region21
    $region20: #{tpu_custom_call.1} parent=1 // pred_region
      %40 = dma.done [#allocation7], 2048
    $region21: #{tpu_custom_call.1} parent=1 // pred_fallthru
      _
    %p41 = scmp.eq.s32.totalorder 0, 0
    // Predicated region
    $region22: #{tpu_custom_call.1} parent=1 // pred_check
      %p42 = pneg %p41
    $region23: #{tpu_custom_call.1} parent=1 // pred_check_branch
      %44 = sbr.rel (%p42) target = $region25
    $region24: #{tpu_custom_call.1} parent=1 // pred_region
      %v45 = vld [vmem:[%s2] sm:$0x1]
      %v47 = vlaneseq
      %v48 = vshrl.u32 %v47, 7
      %v49 = vsub.s32 0, %v48
      %v50 = vrot.slane %v45, %v49
      %52 = vst [vmem:[#allocation2] sm:$0xff] %v50
    $region25: #{tpu_custom_call.1} parent=1 // pred_fallthru
      _
    %v53 = vld [vmem:[#allocation3] sm:$0xff]
    %v54 = vld [vmem:[#allocation6] sm:$0xff]
    %v55 = vld [vmem:[#allocation6 + $0x8] sm:$0xff]
    %v56 = vld [vmem:[#allocation6 + $0x10] sm:$0xff]
    %v57 = vld [vmem:[#allocation6 + $0x18] sm:$0xff]
    %v58 = vld [vmem:[#allocation6 + $0x20] sm:$0xff]
    %v59 = vld [vmem:[#allocation6 + $0x28] sm:$0xff]
    %v60 = vld [vmem:[#allocation6 + $0x30] sm:$0xff]
    %v61 = vld [vmem:[#allocation6 + $0x38] sm:$0xff]
    %v62 = vld [vmem:[#allocation6 + $0x40] sm:$0xff]
    %v63 = vld [vmem:[#allocation6 + $0x48] sm:$0xff]
    %v64 = vld [vmem:[#allocation6 + $0x50] sm:$0xff]
    %v65 = vld [vmem:[#allocation6 + $0x58] sm:$0xff]
    %v66 = vld [vmem:[#allocation6 + $0x60] sm:$0xff]
    %v67 = vld [vmem:[#allocation6 + $0x68] sm:$0xff]
    %v68 = vld [vmem:[#allocation6 + $0x70] sm:$0xff]
    %v69 = vld [vmem:[#allocation6 + $0x78] sm:$0xff]
    %v70 = vmax.f32 %v54, 0.0
    %v71 = vmax.f32 %v55, 0.0
    %v72 = vmax.f32 %v56, 0.0
    %v73 = vmax.f32 %v57, 0.0
    %v74 = vmax.f32 %v58, 0.0
    %v75 = vmax.f32 %v59, 0.0
    %v76 = vmax.f32 %v60, 0.0
    %v77 = vmax.f32 %v61, 0.0
    %v78 = vmax.f32 %v62, 0.0
    %v79 = vmax.f32 %v63, 0.0
    %v80 = vmax.f32 %v64, 0.0
    %v81 = vmax.f32 %v65, 0.0
    %v82 = vmax.f32 %v66, 0.0
    %v83 = vmax.f32 %v67, 0.0
    %v84 = vmax.f32 %v68, 0.0
    %v85 = vmax.f32 %v69, 0.0
    %v86 = vand.u32 2147483647, %v54
    %v87 = vand.u32 2147483647, %v55
    %v88 = vand.u32 2147483647, %v56
    %v89 = vand.u32 2147483647, %v57
    %v90 = vand.u32 2147483647, %v58
    %v91 = vand.u32 2147483647, %v59
    %v92 = vand.u32 2147483647, %v60
    %v93 = vand.u32 2147483647, %v61
    %v94 = vand.u32 2147483647, %v62
    %v95 = vand.u32 2147483647, %v63
    %v96 = vand.u32 2147483647, %v64
    %v97 = vand.u32 2147483647, %v65
    %v98 = vand.u32 2147483647, %v66
    %v99 = vand.u32 2147483647, %v67
    %v100 = vand.u32 2147483647, %v68
    %v101 = vand.u32 2147483647, %v69
    %v102 = vsub.f32 0.0, %v86
    %v103 = vsub.f32 0.0, %v87
    %v104 = vsub.f32 0.0, %v88
    %v105 = vsub.f32 0.0, %v89
    %v106 = vsub.f32 0.0, %v90
    %v107 = vsub.f32 0.0, %v91
    %v108 = vsub.f32 0.0, %v92
    %v109 = vsub.f32 0.0, %v93
    %v110 = vsub.f32 0.0, %v94
    %v111 = vsub.f32 0.0, %v95
    %v112 = vsub.f32 0.0, %v96
    %v113 = vsub.f32 0.0, %v97
    %v114 = vsub.f32 0.0, %v98
    %v115 = vsub.f32 0.0, %v99
    %v116 = vsub.f32 0.0, %v100
    %v117 = vsub.f32 0.0, %v101
    %v118 = vmul.f32 %v102, 1.442695
    %v119 = vpow.pop %v118
    %v120 = vmul.f32 %v103, 1.442695
    %v121 = vpow.pop %v120
    %v122 = vmul.f32 %v104, 1.442695
    %v123 = vpow.pop %v122
    %v124 = vmul.f32 %v105, 1.442695
    %v125 = vpow.pop %v124
    %v126 = vmul.f32 %v106, 1.442695
    %v127 = vpow.pop %v126
    %v128 = vmul.f32 %v107, 1.442695
    %v129 = vpow.pop %v128
    %v130 = vmul.f32 %v108, 1.442695
    %v131 = vpow.pop %v130
    %v132 = vmul.f32 %v109, 1.442695
    %v133 = vpow.pop %v132
    %v134 = vmul.f32 %v110, 1.442695
    %v135 = vpow.pop %v134
    %v136 = vmul.f32 %v111, 1.442695
    %v137 = vpow.pop %v136
    %v138 = vmul.f32 %v112, 1.442695
    %v139 = vpow.pop %v138
    %v140 = vmul.f32 %v113, 1.442695
    %v141 = vpow.pop %v140
    %v142 = vmul.f32 %v114, 1.442695
    %v143 = vpow.pop %v142
    %v144 = vmul.f32 %v115, 1.442695
    %v145 = vpow.pop %v144
    %v146 = vmul.f32 %v116, 1.442695
    %v147 = vpow.pop %v146
    %v148 = vmul.f32 %v117, 1.442695
    %v149 = vpow.pop %v148
    %v150 = vadd.f32 %v119, 1.0
    %v151 = vlog2.pop %v150
    %v152 = vmul.f32 %v151, 0.6931472
    %v153 = vmul.f32 -0.5, %v119
    %v154 = vadd.f32 %v153, 1.0
    %v155 = vmul.f32 %v154, %v119
    %v156 = vand.u32 2147483647, %v119
    %vm157 = vcmp.lt.f32.partialorder %v156, 0.0004427343
    %v158 = vsel %vm157, %v155, %v152
    %v159 = vadd.f32 %v121, 1.0
    %v160 = vlog2.pop %v159
    %v161 = vmul.f32 %v160, 0.6931472
    %v162 = vmul.f32 -0.5, %v121
    %v163 = vadd.f32 %v162, 1.0
    %v164 = vmul.f32 %v163, %v121
    %v165 = vand.u32 2147483647, %v121
    %vm166 = vcmp.lt.f32.partialorder %v165, 0.0004427343
    %v167 = vsel %vm166, %v164, %v161
    %v168 = vadd.f32 %v123, 1.0
    %v169 = vlog2.pop %v168
    %v170 = vmul.f32 %v169, 0.6931472
    %v171 = vmul.f32 -0.5, %v123
    %v172 = vadd.f32 %v171, 1.0
    %v173 = vmul.f32 %v172, %v123
    %v174 = vand.u32 2147483647, %v123
    %vm175 = vcmp.lt.f32.partialorder %v174, 0.0004427343
    %v176 = vsel %vm175, %v173, %v170
    %v177 = vadd.f32 %v125, 1.0
    %v178 = vlog2.pop %v177
    %v179 = vmul.f32 %v178, 0.6931472
    %v180 = vmul.f32 -0.5, %v125
    %v181 = vadd.f32 %v180, 1.0
    %v182 = vmul.f32 %v181, %v125
    %v183 = vand.u32 2147483647, %v125
    %vm184 = vcmp.lt.f32.partialorder %v183, 0.0004427343
    %v185 = vsel %vm184, %v182, %v179
    %v186 = vadd.f32 %v127, 1.0
    %v187 = vlog2.pop %v186
    %v188 = vmul.f32 %v187, 0.6931472
    %v189 = vmul.f32 -0.5, %v127
    %v190 = vadd.f32 %v189, 1.0
    %v191 = vmul.f32 %v190, %v127
    %v192 = vand.u32 2147483647, %v127
    %vm193 = vcmp.lt.f32.partialorder %v192, 0.0004427343
    %v194 = vsel %vm193, %v191, %v188
    %v195 = vadd.f32 %v129, 1.0
    %v196 = vlog2.pop %v195
    %v197 = vmul.f32 %v196, 0.6931472
    %v198 = vmul.f32 -0.5, %v129
    %v199 = vadd.f32 %v198, 1.0
    %v200 = vmul.f32 %v199, %v129
    %v201 = vand.u32 2147483647, %v129
    %vm202 = vcmp.lt.f32.partialorder %v201, 0.0004427343
    %v203 = vsel %vm202, %v200, %v197
    %v204 = vadd.f32 %v131, 1.0
    %v205 = vlog2.pop %v204
    %v206 = vmul.f32 %v205, 0.6931472
    %v207 = vmul.f32 -0.5, %v131
    %v208 = vadd.f32 %v207, 1.0
    %v209 = vmul.f32 %v208, %v131
    %v210 = vand.u32 2147483647, %v131
    %vm211 = vcmp.lt.f32.partialorder %v210, 0.0004427343
    %v212 = vsel %vm211, %v209, %v206
    %v213 = vadd.f32 %v133, 1.0
    %v214 = vlog2.pop %v213
    %v215 = vmul.f32 %v214, 0.6931472
    %v216 = vmul.f32 -0.5, %v133
    %v217 = vadd.f32 %v216, 1.0
    %v218 = vmul.f32 %v217, %v133
    %v219 = vand.u32 2147483647, %v133
    %vm220 = vcmp.lt.f32.partialorder %v219, 0.0004427343
    %v221 = vsel %vm220, %v218, %v215
    %v222 = vadd.f32 %v135, 1.0
    %v223 = vlog2.pop %v222
    %v224 = vmul.f32 %v223, 0.6931472
    %v225 = vmul.f32 -0.5, %v135
    %v226 = vadd.f32 %v225, 1.0
    %v227 = vmul.f32 %v226, %v135
    %v228 = vand.u32 2147483647, %v135
    %vm229 = vcmp.lt.f32.partialorder %v228, 0.0004427343
    %v230 = vsel %vm229, %v227, %v224
    %v231 = vadd.f32 %v137, 1.0
    %v232 = vlog2.pop %v231
    %v233 = vmul.f32 %v232, 0.6931472
    %v234 = vmul.f32 -0.5, %v137
    %v235 = vadd.f32 %v234, 1.0
    %v236 = vmul.f32 %v235, %v137
    %v237 = vand.u32 2147483647, %v137
    %vm238 = vcmp.lt.f32.partialorder %v237, 0.0004427343
    %v239 = vsel %vm238, %v236, %v233
    %v240 = vadd.f32 %v139, 1.0
    %v241 = vlog2.pop %v240
    %v242 = vmul.f32 %v241, 0.6931472
    %v243 = vmul.f32 -0.5, %v139
    %v244 = vadd.f32 %v243, 1.0
    %v245 = vmul.f32 %v244, %v139
    %v246 = vand.u32 2147483647, %v139
    %vm247 = vcmp.lt.f32.partialorder %v246, 0.0004427343
    %v248 = vsel %vm247, %v245, %v242
    %v249 = vadd.f32 %v141, 1.0
    %v250 = vlog2.pop %v249
    %v251 = vmul.f32 %v250, 0.6931472
    %v252 = vmul.f32 -0.5, %v141
    %v253 = vadd.f32 %v252, 1.0
    %v254 = vmul.f32 %v253, %v141
    %v255 = vand.u32 2147483647, %v141
    %vm256 = vcmp.lt.f32.partialorder %v255, 0.0004427343
    %v257 = vsel %vm256, %v254, %v251
    %v258 = vadd.f32 %v143, 1.0
    %v259 = vlog2.pop %v258
    %v260 = vmul.f32 %v259, 0.6931472
    %v261 = vmul.f32 -0.5, %v143
    %v262 = vadd.f32 %v261, 1.0
    %v263 = vmul.f32 %v262, %v143
    %v264 = vand.u32 2147483647, %v143
    %vm265 = vcmp.lt.f32.partialorder %v264, 0.0004427343
    %v266 = vsel %vm265, %v263, %v260
    %v267 = vadd.f32 %v145, 1.0
    %v268 = vlog2.pop %v267
    %v269 = vmul.f32 %v268, 0.6931472
    %v270 = vmul.f32 -0.5, %v145
    %v271 = vadd.f32 %v270, 1.0
    %v272 = vmul.f32 %v271, %v145
    %v273 = vand.u32 2147483647, %v145
    %vm274 = vcmp.lt.f32.partialorder %v273, 0.0004427343
    %v275 = vsel %vm274, %v272, %v269
    %v276 = vadd.f32 %v147, 1.0
    %v277 = vlog2.pop %v276
    %v278 = vmul.f32 %v277, 0.6931472
    %v279 = vmul.f32 -0.5, %v147
    %v280 = vadd.f32 %v279, 1.0
    %v281 = vmul.f32 %v280, %v147
    %v282 = vand.u32 2147483647, %v147
    %vm283 = vcmp.lt.f32.partialorder %v282, 0.0004427343
    %v284 = vsel %vm283, %v281, %v278
    %v285 = vadd.f32 %v149, 1.0
    %v286 = vlog2.pop %v285
    %v287 = vmul.f32 %v286, 0.6931472
    %v288 = vmul.f32 -0.5, %v149
    %v289 = vadd.f32 %v288, 1.0
    %v290 = vmul.f32 %v289, %v149
    %v291 = vand.u32 2147483647, %v149
    %vm292 = vcmp.lt.f32.partialorder %v291, 0.0004427343
    %v293 = vsel %vm292, %v290, %v287
    %v294 = vadd.f32 %v70, %v158
    %v295 = vadd.f32 %v71, %v167
    %v296 = vadd.f32 %v72, %v176
    %v297 = vadd.f32 %v73, %v185
    %v298 = vadd.f32 %v74, %v194
    %v299 = vadd.f32 %v75, %v203
    %v300 = vadd.f32 %v76, %v212
    %v301 = vadd.f32 %v77, %v221
    %v302 = vadd.f32 %v78, %v230
    %v303 = vadd.f32 %v79, %v239
    %v304 = vadd.f32 %v80, %v248
    %v305 = vadd.f32 %v81, %v257
    %v306 = vadd.f32 %v82, %v266
    %v307 = vadd.f32 %v83, %v275
    %v308 = vadd.f32 %v84, %v284
    %v309 = vadd.f32 %v85, %v293
    %v310 = vld [vmem:[#allocation2] sm:$0xff]
    %311 = vmatprep.subr.mxu0 0.0
    %312 = vmatpush1.xpose.msra.mxu0 %v294
    %313 = vmatprep.subr.mxu0 0.0
    %314 = vmatpush1.xpose.msra.mxu0 %v295
    %315 = vmatprep.subr.mxu0 0.0
    %316 = vmatpush1.xpose.msra.mxu0 %v296
    %317 = vmatprep.subr.mxu0 0.0
    %318 = vmatpush1.xpose.msra.mxu0 %v297
    %319 = vmatprep.subr.mxu0 0.0
    %320 = vmatpush1.xpose.msra.mxu0 %v298
    %321 = vmatprep.subr.mxu0 0.0
    %322 = vmatpush1.xpose.msra.mxu0 %v299
    %323 = vmatprep.subr.mxu0 0.0
    %324 = vmatpush1.xpose.msra.mxu0 %v300
    %325 = vmatprep.subr.mxu0 0.0
    %326 = vmatpush1.xpose.msra.mxu0 %v301
    %327 = vmatprep.subr.mxu0 0.0
    %328 = vmatpush1.xpose.msra.mxu0 %v302
    %329 = vmatprep.subr.mxu0 0.0
    %330 = vmatpush1.xpose.msra.mxu0 %v303
    %331 = vmatprep.subr.mxu0 0.0
    %332 = vmatpush1.xpose.msra.mxu0 %v304
    %333 = vmatprep.subr.mxu0 0.0
    %334 = vmatpush1.xpose.msra.mxu0 %v305
    %335 = vmatprep.subr.mxu0 0.0
    %336 = vmatpush1.xpose.msra.mxu0 %v306
    %337 = vmatprep.subr.mxu0 0.0
    %338 = vmatpush1.xpose.msra.mxu0 %v307
    %339 = vmatprep.subr.mxu0 0.0
    %340 = vmatpush1.xpose.msra.mxu0 %v308
    %341 = vmatprep.subr.mxu0 0.0
    %342 = vmatpush1.xpose.msra.mxu0 %v309
    %343 = vmatprep.subr.mxu0 0.0
    %344 = vmatpush1.xpose.msra.mxu0 0.0
    %345 = vmatprep.subr.mxu0 0.0
    %346 = vmatpush1.xpose.msra.mxu0 0.0
    %347 = vmatprep.subr.mxu0 0.0
    %348 = vmatpush1.xpose.msra.mxu0 0.0
    %349 = vmatprep.subr.mxu0 0.0
    %350 = vmatpush1.xpose.msra.mxu0 0.0
    %351 = vmatprep.subr.mxu0 0.0
    %352 = vmatpush1.xpose.msra.mxu0 0.0
    %353 = vmatprep.subr.mxu0 0.0
    %354 = vmatpush1.xpose.msra.mxu0 0.0
    %355 = vmatprep.subr.mxu0 0.0
    %356 = vmatpush1.xpose.msra.mxu0 0.0
    %357 = vmatprep.subr.mxu0 0.0
    %358 = vmatpush1.xpose.msra.mxu0 0.0
    %359 = vmatprep.subr.mxu0 0.0
    %360 = vmatpush1.xpose.msra.mxu0 0.0
    %361 = vmatprep.subr.mxu0 0.0
    %362 = vmatpush1.xpose.msra.mxu0 0.0
    %363 = vmatprep.subr.mxu0 0.0
    %364 = vmatpush1.xpose.msra.mxu0 0.0
    %365 = vmatprep.subr.mxu0 0.0
    %366 = vmatpush1.xpose.msra.mxu0 0.0
    %367 = vmatprep.subr.mxu0 0.0
    %368 = vmatpush1.xpose.msra.mxu0 0.0
    %369 = vmatprep.subr.mxu0 0.0
    %370 = vmatpush1.xpose.msra.mxu0 0.0
    %371 = vmatprep.subr.mxu0 0.0
    %372 = vmatpush1.xpose.msra.mxu0 0.0
    %373 = vmatprep.subr.mxu0 0.0
    %374 = vmatpush1.xpose.msra.mxu0 0.0
    %375 = vmatprep.mubr.f32.mxu0 0.0
    %376 = vmatmul.mubr.f32.gmra.mrb[0].mxu0 %v53
    %v377 = vpop.f32.mrb[0].mxu0
    %v378 = vadd.f32 0.0, %v377
    %v379 = vpop.f32.mrb[0].mxu0
    %380 = vdwg.mxu0
    %v381 = vadd.f32 %v310, %v378
    %382 = vst [vmem:[#allocation2] sm:$0xff] %v381
    // Predicated region
    $region26: #{tpu_custom_call.1} parent=1 // pred_check
      %p383 = pneg %p41
    $region27: #{tpu_custom_call.1} parent=1 // pred_check_branch
      %385 = sbr.rel (%p383) target = $region29
    $region28: #{tpu_custom_call.1} parent=1 // pred_region
      %v386 = vld [vmem:[#allocation2] sm:$0xff]
      %387 = vst [vmem:[#allocation8] sm:$0xff] %v386
    $region29: #{tpu_custom_call.1} parent=1 // pred_fallthru
      _
    // Predicated region
    $region30: #{tpu_custom_call.1} parent=1 // pred_check
      _
    $region31: #{tpu_custom_call.1} parent=1 // pred_check_branch
      %389 = sbr.rel (0) target = $region33
    $region32: #{tpu_custom_call.1} parent=1 // pred_region
      %s391 = ssub.s32 128, 128
      %392 = vsyncadd [#allocation5], %s391
      %s394 = sshll.u32 [#allocation8], 4
      %s395 = int_to_ptr.vmem [resolvable:$true] %s394
      %397 = dma.vmem_to_hbm [thread:$0]  %s395, 128, %s3, [#allocation5]
    $region33: #{tpu_custom_call.1} parent=1 // pred_fallthru
      _
    // Predicated region
    $region34: #{tpu_custom_call.1} parent=1 // pred_check
      _
    $region35: #{tpu_custom_call.1} parent=1 // pred_check_branch
      %399 = sbr.rel (0) target = $region37
    $region36: #{tpu_custom_call.1} parent=1 // pred_region
      %400 = dma.done [#allocation5], 128
    $region37: #{tpu_custom_call.1} parent=1 // pred_fallthru
      _
    %401 = vsyncpa [#allocation4], 1
    %402 = vsyncpa [#allocation7], 1
    %403 = vsyncpa [#allocation5], 1

</llo_original>
